<compile_context>
chip_gen: v6e
topology: v6e:2x2x1
jax: 0.10.0
libtpu: 0.0.40
codegen_flags: <defaults>
</compile_context>

<pallas_src>
import jax
import jax.numpy as jnp
from jax.experimental import pallas as pl
from jax.experimental.pallas import tpu as pltpu

FPAD = 128      # padded hidden feature width (lanes)
HID = 16        # real hidden width
SUB = 8         # sublane multiple for the batch dimension
DEFAULT_TB = 1024  # batch tile (rows per grid step); safe on v5e/v6e/v7x VMEM


def _mlp_kernel(x_ref, sp_ref, w_ref, o_ref):
    """x_ref: (TB, 1); sp_ref: (8, 128) packed small params;
    w_ref: (2, 128, 128) padded W2/W3; o_ref: (TB, 1)."""
    x = x_ref[...]                       # (TB, 1)
    sp = sp_ref[...]                     # (8, 128)

    w1 = sp[0:1, :]                      # (1, 128)  layer1 weight row (padded)
    b1 = sp[1:2, :]                      # (1, 128)
    b2 = sp[2:3, :]                      # (1, 128)
    b3 = sp[3:4, :]                      # (1, 128)
    w4 = sp[4:5, :]                      # (1, 128)  layer4 weight column (padded)
    b4 = sp[5:6, 0:1]                    # (1, 1)

    # Layer 1: (TB,1) x (1,128) broadcast outer product on the VPU (no MXU).
    h = jnp.maximum(x * w1 + b1, 0.0)    # (TB, 128); lanes >=16 stay exactly 0

    # Layers 2 & 3: 128x128 padded matmuls on the MXU (weights VMEM-resident).
    h = jnp.maximum(
        jnp.dot(h, w_ref[0], preferred_element_type=jnp.float32) + b2, 0.0)
    h = jnp.maximum(
        jnp.dot(h, w_ref[1], preferred_element_type=jnp.float32) + b3, 0.0)

    # Layer 4: elementwise mul + lane reduction -> narrow (TB, 1) store.
    o_ref[...] = jnp.sum(h * w4, axis=-1, keepdims=True) + b4


def init_params(key):
    """Deterministic init matching nn.Linear default (uniform +-1/sqrt(fan_in)).

    Weights are returned in (in_features, out_features) layout.
    """
    dims = [(1, HID), (HID, HID), (HID, HID), (HID, 1)]
    params = []
    for i, (fan_in, fan_out) in enumerate(dims):
        kw, kb = jax.random.split(jax.random.fold_in(key, i))
        bound = 1.0 / jnp.sqrt(jnp.float32(fan_in))
        w = jax.random.uniform(kw, (fan_in, fan_out), jnp.float32, -bound, bound)
        b = jax.random.uniform(kb, (fan_out,), jnp.float32, -bound, bound)
        params.append((w, b))
    return params


def pack_params(params):
    """One-time packing/padding (hoisted out of the forward path).

    Returns:
      small:  (8, 128)      rows: w1_row, b1, b2, b3, w4_col, b4(lane 0)
      wstack: (2, 128, 128) padded W2, W3
    """
    (w1, b1), (w2, b2), (w3, b3), (w4, b4) = params
    small = jnp.zeros((SUB, FPAD), jnp.float32)
    small = small.at[0, :HID].set(w1[0, :])        # (1,16) -> row
    small = small.at[1, :HID].set(b1)
    small = small.at[2, :HID].set(b2)
    small = small.at[3, :HID].set(b3)
    small = small.at[4, :HID].set(w4[:, 0])        # (16,1) -> column as row
    small = small.at[5, 0].set(b4[0])

    wstack = jnp.zeros((2, FPAD, FPAD), jnp.float32)
    wstack = wstack.at[0, :HID, :HID].set(w2)
    wstack = wstack.at[1, :HID, :HID].set(w3)
    return small, wstack


def mlp_forward(x, packed, tile=DEFAULT_TB):
    """x: (batch, 1) float32 -> (batch, 1) float32."""
    small, wstack = packed
    batch = x.shape[0]
    bpad = ((batch + SUB - 1) // SUB) * SUB
    tb = min(tile, bpad)

    x_p = x.astype(jnp.float32)
    if bpad != batch:
        x_p = jnp.pad(x_p, ((0, bpad - batch), (0, 0)))

    out = pl.pallas_call(
        _mlp_kernel,
        out_shape=jax.ShapeDtypeStruct((bpad, 1), jnp.float32),
        grid=(pl.cdiv(bpad, tb),),
        in_specs=[
            pl.BlockSpec((tb, 1), lambda i: (i, 0)),              # x tile
            pl.BlockSpec((SUB, FPAD), lambda i: (0, 0)),          # small params
            pl.BlockSpec((2, FPAD, FPAD), lambda i: (0, 0, 0)),   # W2/W3 stack
        ],
        out_specs=pl.BlockSpec((tb, 1), lambda i: (i, 0)),
        compiler_params=pltpu.CompilerParams(
            dimension_semantics=("parallel",)),
    )(x_p, small, wstack)

    return out[:batch]


def mlp_reference(x, params):
    h = x.astype(jnp.float32)
    for i, (w, b) in enumerate(params):
        h = h @ w + b
        if i < len(params) - 1:
            h = jnp.maximum(h, 0.0)
    return h


if __name__ == "__main__":
    key = jax.random.PRNGKey(0)
    pkey, xkey = jax.random.split(key)

    params = init_params(pkey)
    packed = pack_params(params)            # padding hoisted out of forward

    x = jax.random.normal(xkey, (8, 1), jnp.float32)   # batch=8, in_features=1

    y = mlp_forward(x, packed)
    y = jax.block_until_ready(y)

    y_ref = mlp_reference(x, params)
    assert y.shape == (8, 1)
    assert jnp.allclose(y, y_ref, atol=1e-5, rtol=1e-5), (y, y_ref)

    print("KERNEL_OK")
</pallas_src>

<mosaic_0001>
module attributes {stable_mosaic.version = 11 : i64} {
  func.func @_mlp_kernel(%arg0: i32, %arg1: memref<8x1xf32, #tpu.memory_space<vmem>>, %arg2: memref<8x128xf32, #tpu.memory_space<vmem>>, %arg3: memref<2x128x128xf32, #tpu.memory_space<vmem>>, %arg4: memref<8x1xf32, #tpu.memory_space<vmem>>) attributes {dimension_semantics = [#tpu.dimension_semantics<parallel>], iteration_bounds = array<i64: 1>, scalar_prefetch = 0 : i64, scratch_operands = 0 : i64, tpu.core_type = #tpu.core_type<tc>, window_params = [{transform_indices = @transform_0, window_bounds = array<i64: 8, 1>}, {pipeline_mode = #tpu.pipeline_mode<synchronous>, transform_indices = @transform_1, window_bounds = array<i64: 8, 128>}, {pipeline_mode = #tpu.pipeline_mode<synchronous>, transform_indices = @transform_2, window_bounds = array<i64: 2, 128, 128>}, {transform_indices = @transform_3, window_bounds = array<i64: 8, 1>}]} {
    %c0 = arith.constant 0 : index
    %c0_0 = arith.constant 0 : index
    %0 = vector.load %arg1[%c0, %c0_0] : memref<8x1xf32, #tpu.memory_space<vmem>>, vector<8x1xf32>
    %c0_1 = arith.constant 0 : index
    %c0_2 = arith.constant 0 : index
    %1 = vector.load %arg2[%c0_1, %c0_2] : memref<8x128xf32, #tpu.memory_space<vmem>>, vector<8x128xf32>
    %2 = vector.extract_strided_slice %1 {offsets = [0, 0], sizes = [1, 128], strides = [1, 1]} : vector<8x128xf32> to vector<1x128xf32>
    %3 = vector.extract_strided_slice %1 {offsets = [1, 0], sizes = [1, 128], strides = [1, 1]} : vector<8x128xf32> to vector<1x128xf32>
    %4 = vector.extract_strided_slice %1 {offsets = [2, 0], sizes = [1, 128], strides = [1, 1]} : vector<8x128xf32> to vector<1x128xf32>
    %5 = vector.extract_strided_slice %1 {offsets = [3, 0], sizes = [1, 128], strides = [1, 1]} : vector<8x128xf32> to vector<1x128xf32>
    %6 = vector.extract_strided_slice %1 {offsets = [4, 0], sizes = [1, 128], strides = [1, 1]} : vector<8x128xf32> to vector<1x128xf32>
    %7 = vector.extract_strided_slice %1 {offsets = [5, 0], sizes = [1, 1], strides = [1, 1]} : vector<8x128xf32> to vector<1x1xf32>
    %8 = vector.broadcast %0 : vector<8x1xf32> to vector<8x128xf32>
    %9 = vector.broadcast %2 : vector<1x128xf32> to vector<8x128xf32>
    %10 = arith.mulf %8, %9 : vector<8x128xf32>
    %11 = vector.broadcast %3 : vector<1x128xf32> to vector<8x128xf32>
    %12 = arith.addf %10, %11 : vector<8x128xf32>
    %cst = arith.constant 0.000000e+00 : f32
    %13 = vector.broadcast %cst : f32 to vector<8x128xf32>
    %14 = arith.maximumf %12, %13 : vector<8x128xf32>
    %c0_3 = arith.constant 0 : index
    %c0_4 = arith.constant 0 : index
    %c0_5 = arith.constant 0 : index
    %15 = vector.load %arg3[%c0_3, %c0_4, %c0_5] : memref<2x128x128xf32, #tpu.memory_space<vmem>>, vector<1x128x128xf32>
    %16 = vector.shape_cast %15 : vector<1x128x128xf32> to vector<128x128xf32>
    %cst_6 = arith.constant dense<0.000000e+00> : vector<8x128xf32>
    %17 = tpu.matmul %14, %16, %cst_6 {dimension_numbers = #tpu.dot_dimension_numbers<[1], [0], [0], [1], [0, 0, 1, 1], [], []>} : vector<8x128xf32>, vector<128x128xf32>, vector<8x128xf32> -> vector<8x128xf32>
    %18 = vector.broadcast %4 : vector<1x128xf32> to vector<8x128xf32>
    %19 = arith.addf %17, %18 : vector<8x128xf32>
    %cst_7 = arith.constant 0.000000e+00 : f32
    %20 = vector.broadcast %cst_7 : f32 to vector<8x128xf32>
    %21 = arith.maximumf %19, %20 : vector<8x128xf32>
    %c1 = arith.constant 1 : index
    %c0_8 = arith.constant 0 : index
    %c0_9 = arith.constant 0 : index
    %22 = vector.load %arg3[%c1, %c0_8, %c0_9] : memref<2x128x128xf32, #tpu.memory_space<vmem>>, vector<1x128x128xf32>
    %23 = vector.shape_cast %22 : vector<1x128x128xf32> to vector<128x128xf32>
    %cst_10 = arith.constant dense<0.000000e+00> : vector<8x128xf32>
    %24 = tpu.matmul %21, %23, %cst_10 {dimension_numbers = #tpu.dot_dimension_numbers<[1], [0], [0], [1], [0, 0, 1, 1], [], []>} : vector<8x128xf32>, vector<128x128xf32>, vector<8x128xf32> -> vector<8x128xf32>
    %25 = vector.broadcast %5 : vector<1x128xf32> to vector<8x128xf32>
    %26 = arith.addf %24, %25 : vector<8x128xf32>
    %cst_11 = arith.constant 0.000000e+00 : f32
    %27 = vector.broadcast %cst_11 : f32 to vector<8x128xf32>
    %28 = arith.maximumf %26, %27 : vector<8x128xf32>
    %29 = vector.broadcast %6 : vector<1x128xf32> to vector<8x128xf32>
    %30 = arith.mulf %28, %29 : vector<8x128xf32>
    %cst_12 = arith.constant dense<0.000000e+00> : vector<8xf32>
    %31 = vector.multi_reduction <add>, %30, %cst_12 [1] : vector<8x128xf32> to vector<8xf32>
    %32 = vector.shape_cast %31 : vector<8xf32> to vector<8x1xf32>
    %33 = vector.broadcast %7 : vector<1x1xf32> to vector<8x1xf32>
    %34 = arith.addf %32, %33 : vector<8x1xf32>
    %c0_13 = arith.constant 0 : index
    %c0_14 = arith.constant 0 : index
    %35 = vector.load %arg4[%c0_13, %c0_14] : memref<8x1xf32, #tpu.memory_space<vmem>>, vector<8x1xf32>
    tpu.vector_store %arg4[%c0_13, %c0_14], %34 {strides = array<i32>} : memref<8x1xf32, #tpu.memory_space<vmem>>, vector<8x1xf32>,
    return
  }
  func.func @transform_0(%arg0: i32) -> (i32, i32) {
    %c0_i32 = arith.constant 0 : i32
    %c0_i32_0 = arith.constant 0 : i32
    return %arg0, %c0_i32 : i32, i32
  }
  func.func @transform_1(%arg0: i32) -> (i32, i32) {
    %c0_i32 = arith.constant 0 : i32
    %c0_i32_0 = arith.constant 0 : i32
    %c0_i32_1 = arith.constant 0 : i32
    return %c0_i32, %c0_i32_0 : i32, i32
  }
  func.func @transform_2(%arg0: i32) -> (i32, i32, i32) {
    %c0_i32 = arith.constant 0 : i32
    %c0_i32_0 = arith.constant 0 : i32
    %c0_i32_1 = arith.constant 0 : i32
    %c0_i32_2 = arith.constant 0 : i32
    return %c0_i32, %c0_i32_0, %c0_i32_1 : i32, i32, i32
  }
  func.func @transform_3(%arg0: i32) -> (i32, i32) {
    %c0_i32 = arith.constant 0 : i32
    %c0_i32_0 = arith.constant 0 : i32
    return %arg0, %c0_i32 : i32, i32
  }
}

</mosaic_0001>

<llo_original>
// kernel: tpu_custom_call.1
$region0: #{tpu_custom_call.1}
  #allocation0 [shape = 'u32[]', space=smem, size = 0x4, offset = 0x4, fixed_abs, tag = 'smem constant byte address 0x4 - core index']
  #allocation1 [shape = 'u32[144,128]{1,0:T(1,128)}', space=vmem, size = 0x12000, scoped, tag = 'internal scratch']
  %s0 = inlined_call_operand.vmem [shape: f32[8,1], index: 0, kind: input, shape index: {}]
  %s1 = inlined_call_operand.vmem [shape: f32[8,128], index: 1, kind: input, shape index: {}]
  %s2 = inlined_call_operand.hbm [shape: f32[2,128,128], index: 2, kind: input, shape index: {}]
  %s3 = inlined_call_operand.vmem [shape: f32[8,1], index: 3, kind: output, shape index: {}]
  %s4 = sld [smem:[#allocation0]]
  $region26: #{tpu_custom_call.1} parent=0
    _
  %s6 = ssub.s32 1, %s4
  %s7 = scalar_select 0, %s6, %s4
  $region1: #{tpu_custom_call.1} parent=0
    #allocation2 [shape = 'u8[131072]{0}', space=vmem, size = 0x20000, scoped, tag = 'input window, operand 2, single buffered']
    #allocation3 [shape = 's32[1]{0}', space=sflag, size = 0x4, scoped, tag = 'scoped memory for tpu_custom_call.1']
    %8 = vsyncpa [#allocation3], 0
    // Predicated region
    $region2: #{tpu_custom_call.1} parent=1 // pred_check
      _
    $region3: #{tpu_custom_call.1} parent=1 // pred_check_branch
      %10 = sbr.rel (0) target = $region5
    $region4: #{tpu_custom_call.1} parent=1 // pred_region
      _
    $region5: #{tpu_custom_call.1} parent=1 // pred_fallthru
      _
    // Predicated region
    $region6: #{tpu_custom_call.1} parent=1 // pred_check
      _
    $region7: #{tpu_custom_call.1} parent=1 // pred_check_branch
      %12 = sbr.rel (0) target = $region9
    $region8: #{tpu_custom_call.1} parent=1 // pred_region
      _
    $region9: #{tpu_custom_call.1} parent=1 // pred_fallthru
      _
    // Predicated region
    $region10: #{tpu_custom_call.1} parent=1 // pred_check
      _
    $region11: #{tpu_custom_call.1} parent=1 // pred_check_branch
      %14 = sbr.rel (0) target = $region13
    $region12: #{tpu_custom_call.1} parent=1 // pred_region
      %s16 = ssub.s32 4096, 4096
      %17 = vsyncadd [#allocation3], %s16
      %s18 = sshll.u32 [#allocation2], 4
      %s19 = int_to_ptr.vmem [resolvable:$true] %s18
      %24 = dma.hbm_to_vmem [thread:$0]  %s2, 4096, %s19, [#allocation3], 128, 128, 8
    $region13: #{tpu_custom_call.1} parent=1 // pred_fallthru
      _
    // Predicated region
    $region14: #{tpu_custom_call.1} parent=1 // pred_check
      _
    $region15: #{tpu_custom_call.1} parent=1 // pred_check_branch
      %26 = sbr.rel (0) target = $region17
    $region16: #{tpu_custom_call.1} parent=1 // pred_region
      %27 = dma.done [#allocation3], 4096
    $region17: #{tpu_custom_call.1} parent=1 // pred_fallthru
      _
    %v28 = vld [vmem:[%s0] sm:$0xff]
    %v29 = vld [vmem:[%s1] sm:$0xff]
    %31 = vset.pattern.permute.xlu0 0
    %32 = vperm.xlu0 %31, %v28
    %v33 = vpop.permute.xlu0 %32
    %v35 = vlaneseq
    %v36 = vshrl.u32 %v35, 7
    %v37 = vsub.s32 0, %v36
    %v38 = vrot.slane %v29, %v37
    %v39 = vmul.f32 %v33, %v38
    %v40 = vlaneseq
    %v41 = vshrl.u32 %v40, 7
    %v42 = vsub.s32 1, %v41
    %v43 = vrot.slane %v29, %v42
    %v44 = vadd.f32 %v39, %v43
    %v45 = vmax.f32 %v44, 0.0
    %v46 = vld [vmem:[#allocation2] sm:$0xff]
    %v47 = vld [vmem:[#allocation2 + $0x8] sm:$0xff]
    %v48 = vld [vmem:[#allocation2 + $0x10] sm:$0xff]
    %v49 = vld [vmem:[#allocation2 + $0x18] sm:$0xff]
    %v50 = vld [vmem:[#allocation2 + $0x20] sm:$0xff]
    %v51 = vld [vmem:[#allocation2 + $0x28] sm:$0xff]
    %v52 = vld [vmem:[#allocation2 + $0x30] sm:$0xff]
    %v53 = vld [vmem:[#allocation2 + $0x38] sm:$0xff]
    %v54 = vld [vmem:[#allocation2 + $0x40] sm:$0xff]
    %v55 = vld [vmem:[#allocation2 + $0x48] sm:$0xff]
    %v56 = vld [vmem:[#allocation2 + $0x50] sm:$0xff]
    %v57 = vld [vmem:[#allocation2 + $0x58] sm:$0xff]
    %v58 = vld [vmem:[#allocation2 + $0x60] sm:$0xff]
    %v59 = vld [vmem:[#allocation2 + $0x68] sm:$0xff]
    %v60 = vld [vmem:[#allocation2 + $0x70] sm:$0xff]
    %v61 = vld [vmem:[#allocation2 + $0x78] sm:$0xff]
    %v62 = vlaneseq
    %v63 = vshrl.u32 %v62, 7
    %v64 = vsub.s32 2, %v63
    %v65 = vrot.slane %v29, %v64
    %66 = vmatprep.subr.mxu0 0.0
    %67 = vmatpush1.msra.mxu0 %v61
    %68 = vmatprep.subr.mxu0 0.0
    %69 = vmatpush1.msra.mxu0 %v60
    %70 = vmatprep.subr.mxu0 0.0
    %71 = vmatpush1.msra.mxu0 %v59
    %72 = vmatprep.subr.mxu0 0.0
    %73 = vmatpush1.msra.mxu0 %v58
    %74 = vmatprep.subr.mxu0 0.0
    %75 = vmatpush1.msra.mxu0 %v57
    %76 = vmatprep.subr.mxu0 0.0
    %77 = vmatpush1.msra.mxu0 %v56
    %78 = vmatprep.subr.mxu0 0.0
    %79 = vmatpush1.msra.mxu0 %v55
    %80 = vmatprep.subr.mxu0 0.0
    %81 = vmatpush1.msra.mxu0 %v54
    %82 = vmatprep.subr.mxu0 0.0
    %83 = vmatpush1.msra.mxu0 %v53
    %84 = vmatprep.subr.mxu0 0.0
    %85 = vmatpush1.msra.mxu0 %v52
    %86 = vmatprep.subr.mxu0 0.0
    %87 = vmatpush1.msra.mxu0 %v51
    %88 = vmatprep.subr.mxu0 0.0
    %89 = vmatpush1.msra.mxu0 %v50
    %90 = vmatprep.subr.mxu0 0.0
    %91 = vmatpush1.msra.mxu0 %v49
    %92 = vmatprep.subr.mxu0 0.0
    %93 = vmatpush1.msra.mxu0 %v48
    %94 = vmatprep.subr.mxu0 0.0
    %95 = vmatpush1.msra.mxu0 %v47
    %96 = vmatprep.subr.mxu0 0.0
    %97 = vmatpush1.msra.mxu0 %v46
    %98 = vmatprep.subr.mxu0 0.0
    %99 = vmatpush2.msra.mxu0 0.0
    %100 = vmatprep.subr.mxu0 0.0
    %101 = vmatpush2.msra.mxu0 0.0
    %102 = vmatprep.subr.mxu0 0.0
    %103 = vmatpush2.msra.mxu0 0.0
    %104 = vmatprep.subr.mxu0 0.0
    %105 = vmatpush2.msra.mxu0 0.0
    %106 = vmatprep.subr.mxu0 0.0
    %107 = vmatpush2.msra.mxu0 0.0
    %108 = vmatprep.subr.mxu0 0.0
    %109 = vmatpush2.msra.mxu0 0.0
    %110 = vmatprep.subr.mxu0 0.0
    %111 = vmatpush2.msra.mxu0 0.0
    %112 = vmatprep.subr.mxu0 0.0
    %113 = vmatpush2.msra.mxu0 0.0
    %114 = vmatprep.subr.mxu0 0.0
    %115 = vmatpush2.msra.mxu0 0.0
    %116 = vmatprep.subr.mxu0 0.0
    %117 = vmatpush2.msra.mxu0 0.0
    %118 = vmatprep.subr.mxu0 0.0
    %119 = vmatpush2.msra.mxu0 0.0
    %120 = vmatprep.subr.mxu0 0.0
    %121 = vmatpush2.msra.mxu0 0.0
    %122 = vmatprep.subr.mxu0 0.0
    %123 = vmatpush2.msra.mxu0 0.0
    %124 = vmatprep.subr.mxu0 0.0
    %125 = vmatpush2.msra.mxu0 0.0
    %126 = vmatprep.subr.mxu0 0.0
    %127 = vmatpush2.msra.mxu0 0.0
    %128 = vmatprep.subr.mxu0 0.0
    %129 = vmatpush2.msra.mxu0 0.0
    %130 = vmatprep.mubr.f32.mxu0 0.0
    %131 = vmatmul.mubr.f32.gmra.mxu0 %v45
    %v132 = vpop.f32.mrf.mxu0
    %v133 = vadd.f32 %v65, %v132
    %v134 = vpop.f32.mrf.mxu0
    %135 = vdwg.mxu0
    %v136 = vmax.f32 %v133, 0.0
    %s137 = scalar_lea.vmem [#allocation2], 128
    %v138 = vld [vmem:[%s137] sm:$0xff]
    %v139 = vld [vmem:[%s137 + $0x8] sm:$0xff]
    %v140 = vld [vmem:[%s137 + $0x10] sm:$0xff]
    %v141 = vld [vmem:[%s137 + $0x18] sm:$0xff]
    %v142 = vld [vmem:[%s137 + $0x20] sm:$0xff]
    %v143 = vld [vmem:[%s137 + $0x28] sm:$0xff]
    %v144 = vld [vmem:[%s137 + $0x30] sm:$0xff]
    %v145 = vld [vmem:[%s137 + $0x38] sm:$0xff]
    %v146 = vld [vmem:[%s137 + $0x40] sm:$0xff]
    %v147 = vld [vmem:[%s137 + $0x48] sm:$0xff]
    %v148 = vld [vmem:[%s137 + $0x50] sm:$0xff]
    %v149 = vld [vmem:[%s137 + $0x58] sm:$0xff]
    %v150 = vld [vmem:[%s137 + $0x60] sm:$0xff]
    %v151 = vld [vmem:[%s137 + $0x68] sm:$0xff]
    %v152 = vld [vmem:[%s137 + $0x70] sm:$0xff]
    %v153 = vld [vmem:[%s137 + $0x78] sm:$0xff]
    %v154 = vlaneseq
    %v155 = vshrl.u32 %v154, 7
    %v156 = vsub.s32 3, %v155
    %v157 = vrot.slane %v29, %v156
    %158 = vmatprep.subr.mxu0 0.0
    %159 = vmatpush1.msra.mxu0 %v153
    %160 = vmatprep.subr.mxu0 0.0
    %161 = vmatpush1.msra.mxu0 %v152
    %162 = vmatprep.subr.mxu0 0.0
    %163 = vmatpush1.msra.mxu0 %v151
    %164 = vmatprep.subr.mxu0 0.0
    %165 = vmatpush1.msra.mxu0 %v150
    %166 = vmatprep.subr.mxu0 0.0
    %167 = vmatpush1.msra.mxu0 %v149
    %168 = vmatprep.subr.mxu0 0.0
    %169 = vmatpush1.msra.mxu0 %v148
    %170 = vmatprep.subr.mxu0 0.0
    %171 = vmatpush1.msra.mxu0 %v147
    %172 = vmatprep.subr.mxu0 0.0
    %173 = vmatpush1.msra.mxu0 %v146
    %174 = vmatprep.subr.mxu0 0.0
    %175 = vmatpush1.msra.mxu0 %v145
    %176 = vmatprep.subr.mxu0 0.0
    %177 = vmatpush1.msra.mxu0 %v144
    %178 = vmatprep.subr.mxu0 0.0
    %179 = vmatpush1.msra.mxu0 %v143
    %180 = vmatprep.subr.mxu0 0.0
    %181 = vmatpush1.msra.mxu0 %v142
    %182 = vmatprep.subr.mxu0 0.0
    %183 = vmatpush1.msra.mxu0 %v141
    %184 = vmatprep.subr.mxu0 0.0
    %185 = vmatpush1.msra.mxu0 %v140
    %186 = vmatprep.subr.mxu0 0.0
    %187 = vmatpush1.msra.mxu0 %v139
    %188 = vmatprep.subr.mxu0 0.0
    %189 = vmatpush1.msra.mxu0 %v138
    %190 = vmatprep.subr.mxu0 0.0
    %191 = vmatpush2.msra.mxu0 0.0
    %192 = vmatprep.subr.mxu0 0.0
    %193 = vmatpush2.msra.mxu0 0.0
    %194 = vmatprep.subr.mxu0 0.0
    %195 = vmatpush2.msra.mxu0 0.0
    %196 = vmatprep.subr.mxu0 0.0
    %197 = vmatpush2.msra.mxu0 0.0
    %198 = vmatprep.subr.mxu0 0.0
    %199 = vmatpush2.msra.mxu0 0.0
    %200 = vmatprep.subr.mxu0 0.0
    %201 = vmatpush2.msra.mxu0 0.0
    %202 = vmatprep.subr.mxu0 0.0
    %203 = vmatpush2.msra.mxu0 0.0
    %204 = vmatprep.subr.mxu0 0.0
    %205 = vmatpush2.msra.mxu0 0.0
    %206 = vmatprep.subr.mxu0 0.0
    %207 = vmatpush2.msra.mxu0 0.0
    %208 = vmatprep.subr.mxu0 0.0
    %209 = vmatpush2.msra.mxu0 0.0
    %210 = vmatprep.subr.mxu0 0.0
    %211 = vmatpush2.msra.mxu0 0.0
    %212 = vmatprep.subr.mxu0 0.0
    %213 = vmatpush2.msra.mxu0 0.0
    %214 = vmatprep.subr.mxu0 0.0
    %215 = vmatpush2.msra.mxu0 0.0
    %216 = vmatprep.subr.mxu0 0.0
    %217 = vmatpush2.msra.mxu0 0.0
    %218 = vmatprep.subr.mxu0 0.0
    %219 = vmatpush2.msra.mxu0 0.0
    %220 = vmatprep.subr.mxu0 0.0
    %221 = vmatpush2.msra.mxu0 0.0
    %222 = vmatprep.mubr.f32.mxu0 0.0
    %223 = vmatmul.mubr.f32.gmra.mxu0 %v136
    %v224 = vpop.f32.mrf.mxu0
    %v225 = vadd.f32 %v157, %v224
    %v226 = vpop.f32.mrf.mxu0
    %227 = vdwg.mxu0
    %v228 = vmax.f32 %v225, 0.0
    %v229 = vlaneseq
    %v230 = vshrl.u32 %v229, 7
    %v231 = vsub.s32 4, %v230
    %v232 = vrot.slane %v29, %v231
    %v233 = vmul.f32 %v228, %v232
    %234 = vadd.xlane.f32.xlu0 %v233
    %v235 = vpop.xlane.xlu0 %234
    %v236 = vlaneseq
    %v237 = vshrl.u32 %v236, 7
    %v238 = vsub.s32 5, %v237
    %v239 = vrot.slane %v29, %v238
    %v240 = vadd.f32 %v235, %v239
    %vm241 = vcmask 7168
    %242 = vst.msk [vmem:[%s3] sm:$0xff] %vm241, %v240
    // Predicated region
    $region18: #{tpu_custom_call.1} parent=1 // pred_check
      _
    $region19: #{tpu_custom_call.1} parent=1 // pred_check_branch
      %244 = sbr.rel (0) target = $region21
    $region20: #{tpu_custom_call.1} parent=1 // pred_region
      _
    $region21: #{tpu_custom_call.1} parent=1 // pred_fallthru
      _
    // Predicated region
    $region22: #{tpu_custom_call.1} parent=1 // pred_check
      _
    $region23: #{tpu_custom_call.1} parent=1 // pred_check_branch
      %246 = sbr.rel (0) target = $region25
    $region24: #{tpu_custom_call.1} parent=1 // pred_region
      _
    $region25: #{tpu_custom_call.1} parent=1 // pred_fallthru
      _
    %247 = vsyncpa [#allocation3], 1

</llo_original>
